<compile_context>
chip_gen: v5e
topology: v5e:2x2
jax: 0.10.0
libtpu: 0.0.40
codegen_flags: <defaults>
</compile_context>

<pallas_src>
import jax
import jax.numpy as jnp
from jax.experimental import pallas as pl
from jax.experimental.pallas import tpu as pltpu

_LANE = 128
_MAX_LANE_CHUNKS = 64          # bound on the statically-unrolled per-block lane loop


# ---------------------------------------------------------------------------
# Generation-aware budgets & tiling plan
# ---------------------------------------------------------------------------
def _budgets():
    """(block_bytes, vmem_limit_bytes), generation-aware.

    v7x: 64 MiB physical VMEM (32 MiB scoped default) -> 4 MiB blocks keep the
    4x double-buffered pipeline <= 16 MiB.  v5e/v6e: 128 MiB -> 6 MiB blocks
    amortize the ~0.35us per-grid-step overhead.  Unknown/query-failure falls
    back to the conservative (v7x) budget.
    """
    try:
        vmem_cap = int(pltpu.get_tpu_info().vmem_capacity_bytes)
    except Exception:
        vmem_cap = 0
    if vmem_cap > 64 * 1024 * 1024:                 # v5e / v6e
        return 6 * 1024 * 1024, 64 * 1024 * 1024
    return 4 * 1024 * 1024, 32 * 1024 * 1024        # v7x or unknown


def _sublane_multiple(dtype):
    # native packed sublane tile: 8 rows (4-byte), 16 (2-byte), 32 (1-byte)
    return {4: 8, 2: 16, 1: 32}.get(jnp.dtype(dtype).itemsize, 8)


def _round_up(x, m):
    return ((x + m - 1) // m) * m


def _cdiv(a, b):
    return (a + b - 1) // b


def _plan(n, c, h, w, dtype):
    """Tiling plan for x viewed as (N*C, H*W).

    Guarantees:
      * hw_t % 128 == 0, hw_t | HW_pad, hw_t/128 <= _MAX_LANE_CHUNKS
      * row_t % sublane_multiple == 0, row_t | R_pad
      * row_t * hw_t * itemsize <= block budget (never a whole-array fallback)
      * >= 2 row blocks whenever R allows it (keeps both v7x TCs busy)
    """
    elt = jnp.dtype(dtype).itemsize
    sub = _sublane_multiple(dtype)
    block_bytes, vmem_limit = _budgets()

    R, HW = n * c, h * w
    HW_pad = _round_up(HW, _LANE)

    # lane tile: largest 128-multiple divisor of HW_pad under the caps
    n_units = HW_pad // _LANE
    cap_units = max(1, min(_MAX_LANE_CHUNKS, block_bytes // (sub * elt * _LANE)))
    k = min(n_units, cap_units)
    while k > 1 and n_units % k != 0:
        k -= 1
    hw_t = k * _LANE

    # row tile: pad R up to a multiple of row_t (waste <= ~1 block of HBM)
    R0 = _round_up(R, sub)
    cap_rows = max(sub, (block_bytes // (hw_t * elt)) // sub * sub)
    n_blocks = _cdiv(R0, cap_rows)
    if R0 >= 2 * sub:                     # megacore: >= 2 blocks on parallel axis
        n_blocks = max(n_blocks, 2)
    row_t = min(_round_up(_cdiv(R0, n_blocks), sub), cap_rows)
    R_pad = _round_up(R0, row_t)

    return dict(R=R, HW=HW, R_pad=R_pad, HW_pad=HW_pad,
                row_t=row_t, hw_t=hw_t, sub=sub, vmem_limit=vmem_limit)


# ---------------------------------------------------------------------------
# Kernels
# ---------------------------------------------------------------------------
def _make_row_sum_kernel(n_chunks):
    """Per-row partial sums into a lane-dense (row_t, 128) resident accumulator.

    Cross-lane reduction is deferred to the wrapper (tiny), so the inner loop
    is pure vld + VPU adds — no per-step XLU reduce, no width-1 masked stores.
    """
    def kernel(x_ref, acc_ref):
        @pl.when(pl.program_id(1) == 0)
        def _():
            acc_ref[...] = jnp.zeros_like(acc_ref)
        acc = acc_ref[...]
        for ci in range(n_chunks):
            sl = slice(ci * _LANE, (ci + 1) * _LANE)
            acc = acc + x_ref[:, sl].astype(jnp.float32)
        acc_ref[...] = acc
    return kernel


def _make_row_centered_sq_sum_kernel(n_chunks):
    """Per-row partial sums of (x + bias)^2 (two-pass variance, PyTorch-exact)."""
    def kernel(x_ref, b_ref, acc_ref):
        @pl.when(pl.program_id(1) == 0)
        def _():
            acc_ref[...] = jnp.zeros_like(acc_ref)
        rows = acc_ref.shape[0]
        b = jnp.broadcast_to(b_ref[...], (rows, _LANE))      # hoisted broadcast
        acc = acc_ref[...]
        for ci in range(n_chunks):
            sl = slice(ci * _LANE, (ci + 1) * _LANE)
            v = x_ref[:, sl].astype(jnp.float32) + b
            acc = acc + v * v
        acc_ref[...] = acc
    return kernel


def _make_affine_kernel(n_chunks, compute_dtype):
    """y = x * a + b in 128-lane chunks; (row_t,1) params broadcast once."""
    def kernel(x_ref, a_ref, b_ref, o_ref):
        rows = o_ref.shape[0]
        a = jnp.broadcast_to(a_ref[...].astype(compute_dtype), (rows, _LANE))
        b = jnp.broadcast_to(b_ref[...].astype(compute_dtype), (rows, _LANE))
        for ci in range(n_chunks):
            sl = slice(ci * _LANE, (ci + 1) * _LANE)
            xc = x_ref[:, sl].astype(compute_dtype)
            o_ref[:, sl] = (xc * a + b).astype(o_ref.dtype)
    return kernel


# ---------------------------------------------------------------------------
# pallas_call wrappers
# ---------------------------------------------------------------------------
def _pallas_row_sum(x2, plan):
    R_pad, HW_pad = x2.shape
    row_t, hw_t = plan["row_t"], plan["hw_t"]
    grid = (R_pad // row_t, HW_pad // hw_t)
    part = pl.pallas_call(
        _make_row_sum_kernel(hw_t // _LANE),
        out_shape=jax.ShapeDtypeStruct((R_pad, _LANE), jnp.float32),
        grid_spec=pltpu.PrefetchScalarGridSpec(
            num_scalar_prefetch=0,
            grid=grid,
            in_specs=[pl.BlockSpec((row_t, hw_t), lambda i, j: (i, j))],
            out_specs=pl.BlockSpec((row_t, _LANE), lambda i, j: (i, 0)),
        ),
        compiler_params=pltpu.CompilerParams(
            dimension_semantics=("parallel", "arbitrary"),
            vmem_limit_bytes=plan["vmem_limit"]),
    )(x2)
    return jnp.sum(part, axis=1)                      # (R_pad,) f32, tiny reduce


def _pallas_row_centered_sq_sum(x2, b_row, plan):
    R_pad, HW_pad = x2.shape
    row_t, hw_t = plan["row_t"], plan["hw_t"]
    grid = (R_pad // row_t, HW_pad // hw_t)
    part = pl.pallas_call(
        _make_row_centered_sq_sum_kernel(hw_t // _LANE),
        out_shape=jax.ShapeDtypeStruct((R_pad, _LANE), jnp.float32),
        grid_spec=pltpu.PrefetchScalarGridSpec(
            num_scalar_prefetch=0,
            grid=grid,
            in_specs=[pl.BlockSpec((row_t, hw_t), lambda i, j: (i, j)),
                      pl.BlockSpec((row_t, 1), lambda i, j: (i, 0))],
            out_specs=pl.BlockSpec((row_t, _LANE), lambda i, j: (i, 0)),
        ),
        compiler_params=pltpu.CompilerParams(
            dimension_semantics=("parallel", "arbitrary"),
            vmem_limit_bytes=plan["vmem_limit"]),
    )(x2, b_row)
    return jnp.sum(part, axis=1)


def _pallas_affine(x2, a_row, b_row, plan, donate=False):
    R_pad, HW_pad = x2.shape
    row_t, hw_t = plan["row_t"], plan["hw_t"]
    grid = (R_pad // row_t, HW_pad // hw_t)
    elt = jnp.dtype(x2.dtype).itemsize
    # bf16 inputs: do the FMA in bf16 (v6e/v7x bf16 VALU) -> half the vreg
    # pressure; everything else computes in f32.
    compute_dtype = x2.dtype if elt == 2 else jnp.float32
    return pl.pallas_call(
        _make_affine_kernel(hw_t // _LANE, compute_dtype),
        out_shape=jax.ShapeDtypeStruct((R_pad, HW_pad), x2.dtype),
        grid_spec=pltpu.PrefetchScalarGridSpec(
            num_scalar_prefetch=0,
            grid=grid,
            in_specs=[pl.BlockSpec((row_t, hw_t), lambda i, j: (i, j)),
                      pl.BlockSpec((row_t, 1), lambda i, j: (i, 0)),
                      pl.BlockSpec((row_t, 1), lambda i, j: (i, 0))],
            out_specs=pl.BlockSpec((row_t, hw_t), lambda i, j: (i, j)),
        ),
        compiler_params=pltpu.CompilerParams(
            dimension_semantics=("parallel", "parallel"),
            vmem_limit_bytes=plan["vmem_limit"]),
        input_output_aliases=({0: 0} if donate else {}),
    )(x2, a_row, b_row)


# ---------------------------------------------------------------------------
# ActNorm module (plain-Python state; kernels do the hot path)
# ---------------------------------------------------------------------------
class ActNorm:
    def __init__(self, num_features, scale=1.0):
        self.num_features = num_features
        self.scale = float(scale)
        self.bias = jnp.zeros((1, num_features, 1, 1), jnp.float32)
        self.logs = jnp.zeros((1, num_features, 1, 1), jnp.float32)
        self.inited = False
        self.training = True
        # TODO(synk): inited/bias/logs are Python-side mutable state; the
        # data-dependent init will not retrace correctly under jax.jit (same
        # caveat as eager PyTorch's lazy init).

    # -- helpers -------------------------------------------------------------
    @staticmethod
    def _flatten_pad(x, plan):
        n, c, h, w = x.shape
        x2 = x.reshape(n * c, h * w)                  # free reshape of NCHW
        pr, pc = plan["R_pad"] - plan["R"], plan["HW_pad"] - plan["HW"]
        if pr or pc:
            x2 = jnp.pad(x2, ((0, pr), (0, pc)))      # zero padding
        return x2

    @staticmethod
    def _pad_rows(v_row, plan):
        pr = plan["R_pad"] - plan["R"]
        if pr:
            v_row = jnp.pad(v_row, ((0, pr), (0, 0)))
        return v_row

    def _per_row(self, per_channel, n):
        c = self.num_features
        return jnp.tile(per_channel[None, :], (n, 1)).reshape(n * c, 1)

    # -- data-dependent init (two HBM passes, like the PyTorch reference) -----
    def initialize_parameters(self, x):
        if not self.training:
            raise ValueError("In Eval mode, but ActNorm not inited")
        n, c, h, w = x.shape
        plan = _plan(n, c, h, w, x.dtype)
        x2 = self._flatten_pad(x, plan)
        R, HW, HW_pad = plan["R"], plan["HW"], plan["HW_pad"]
        cnt = jnp.float32(n * h * w)

        # pass 1: per-channel mean
        row_sum = _pallas_row_sum(x2, plan)                            # (R_pad,)
        mean = row_sum[:R].reshape(n, c).sum(axis=0) / cnt             # (C,)
        bias_c = -mean

        # pass 2: per-channel mean((x + bias)^2)  (two-pass variance)
        b_row = self._pad_rows(self._per_row(bias_c, n).astype(jnp.float32), plan)
        row_sq = _pallas_row_centered_sq_sum(x2, b_row, plan)          # (R_pad,)
        ch_sq = row_sq[:R].reshape(n, c).sum(axis=0)
        if HW_pad != HW:
            # each valid row has (HW_pad - HW) zero-padded columns that
            # contributed (0 + bias)^2 = bias^2 -> remove exactly
            ch_sq = ch_sq - jnp.float32(n * (HW_pad - HW)) * bias_c * bias_c
        var = ch_sq / cnt

        logs = jnp.log(self.scale / (jnp.sqrt(var) + 1e-6))
        self.bias = bias_c.reshape(1, c, 1, 1)
        self.logs = logs.reshape(1, c, 1, 1)
        self.inited = True

    # -- forward / reverse -----------------------------------------------------
    def forward(self, x, logdet=None, reverse=False, donate_input=False):
        if not self.inited:
            self.initialize_parameters(x)
        n, c, h, w = x.shape
        plan = _plan(n, c, h, w, x.dtype)
        x2 = self._flatten_pad(x, plan)

        bias_c = self.bias.reshape(c).astype(jnp.float32)
        logs_c = self.logs.reshape(c).astype(jnp.float32)
        if reverse:
            a_c = jnp.exp(-logs_c)                    # y = x * exp(-logs) - bias
            b_c = -bias_c
        else:
            a_c = jnp.exp(logs_c)                     # y = (x + bias) * exp(logs)
            b_c = bias_c * a_c
        a_row = self._pad_rows(self._per_row(a_c, n), plan)   # (R_pad, 1)
        b_row = self._pad_rows(self._per_row(b_c, n), plan)

        padded = (plan["R_pad"] != plan["R"]) or (plan["HW_pad"] != plan["HW"])
        y2 = _pallas_affine(x2, a_row, b_row, plan,
                            donate=donate_input and not padded)
        if padded:
            y2 = y2[:plan["R"], :plan["HW"]]
        y = y2.reshape(n, c, h, w)

        if logdet is not None:
            dlogdet = jnp.sum(self.logs) * h * w
            if reverse:
                dlogdet = -dlogdet
            logdet = logdet + dlogdet
        return y, logdet


# ---------------------------------------------------------------------------
def _reference(x, scale=1.0):
    mean = jnp.mean(x, axis=(0, 2, 3), keepdims=True)
    bias = -mean
    var = jnp.mean((x + bias) ** 2, axis=(0, 2, 3), keepdims=True)
    logs = jnp.log(scale / (jnp.sqrt(var) + 1e-6))
    y = (x + bias) * jnp.exp(logs)
    logdet = jnp.sum(logs) * x.shape[2] * x.shape[3]
    return y, logdet


if __name__ == "__main__":
    key = jax.random.PRNGKey(0)

    # ---- aligned case: N=2,C=4,H=W=16 -> (N*C, H*W) = (8, 256) --------------
    x = jax.random.normal(key, (2, 4, 16, 16), dtype=jnp.float32) * 2.0 + 0.5
    actnorm = ActNorm(num_features=4, scale=1.0)
    y, logdet = actnorm.forward(x, logdet=jnp.zeros((), jnp.float32))
    y = jax.block_until_ready(y)
    logdet = jax.block_until_ready(logdet)

    y_ref, logdet_ref = _reference(x)
    assert y.shape == x.shape and y.dtype == x.dtype
    assert jnp.allclose(y, y_ref, atol=1e-4, rtol=1e-4)
    assert jnp.allclose(logdet, logdet_ref, atol=1e-3, rtol=1e-4)

    # reverse must invert the forward
    x_rec, _ = actnorm.forward(y, logdet=None, reverse=True)
    x_rec = jax.block_until_ready(x_rec)
    assert jnp.allclose(x_rec, x, atol=1e-4, rtol=1e-4)

    # ---- unaligned case (exercises padding path): N=2,C=3,H=W=6 -------------
    x_u = jax.random.normal(jax.random.PRNGKey(1), (2, 3, 6, 6),
                            dtype=jnp.float32) * 1.5 - 0.3
    actnorm_u = ActNorm(num_features=3, scale=1.0)
    y_u, logdet_u = actnorm_u.forward(x_u, logdet=jnp.zeros((), jnp.float32))
    y_u = jax.block_until_ready(y_u)
    y_u_ref, logdet_u_ref = _reference(x_u)
    assert jnp.allclose(y_u, y_u_ref, atol=1e-4, rtol=1e-4)
    assert jnp.allclose(logdet_u, logdet_u_ref, atol=1e-3, rtol=1e-4)

    print("KERNEL_OK")
</pallas_src>

<mosaic_0001>
module attributes {stable_mosaic.version = 11 : i64} {
  func.func @kernel(%arg0: i32, %arg1: i32, %arg2: memref<8x256xf32, #tpu.memory_space<vmem>>, %arg3: memref<8x128xf32, #tpu.memory_space<vmem>>) attributes {dimension_semantics = [#tpu.dimension_semantics<parallel>, #tpu.dimension_semantics<arbitrary>], iteration_bounds = array<i64: 1, 1>, scalar_prefetch = 0 : i64, scratch_operands = 0 : i64, tpu.core_type = #tpu.core_type<tc>, window_params = [{transform_indices = @transform_0, window_bounds = array<i64: 8, 256>}, {transform_indices = @transform_1, window_bounds = array<i64: 8, 128>}]} {
    %c0_i32 = arith.constant 0 : i32
    %0 = arith.cmpi eq, %arg1, %c0_i32 : i32
    %1 = arith.extui %0 : i1 to i32
    %c0_i32_0 = arith.constant 0 : i32
    %2 = arith.cmpi ne, %1, %c0_i32_0 : i32
    scf.if %2 {
      %cst = arith.constant 0.000000e+00 : f32
      %9 = vector.broadcast %cst : f32 to vector<8x128xf32>
      %c0_7 = arith.constant 0 : index
      %c0_8 = arith.constant 0 : index
      %10 = vector.load %arg3[%c0_7, %c0_8] : memref<8x128xf32, #tpu.memory_space<vmem>>, vector<8x128xf32>
      tpu.vector_store %arg3[%c0_7, %c0_8], %9 {strides = array<i32>} : memref<8x128xf32, #tpu.memory_space<vmem>>, vector<8x128xf32>,
    } else {
    }
    %c0 = arith.constant 0 : index
    %c0_1 = arith.constant 0 : index
    %3 = vector.load %arg3[%c0, %c0_1] : memref<8x128xf32, #tpu.memory_space<vmem>>, vector<8x128xf32>
    %c0_2 = arith.constant 0 : index
    %c0_3 = arith.constant 0 : index
    %4 = vector.load %arg2[%c0_2, %c0_3] : memref<8x256xf32, #tpu.memory_space<vmem>>, vector<8x128xf32>
    %5 = arith.addf %3, %4 : vector<8x128xf32>
    %c0_4 = arith.constant 0 : index
    %c128 = arith.constant 128 : index
    %6 = vector.load %arg2[%c0_4, %c128] : memref<8x256xf32, #tpu.memory_space<vmem>>, vector<8x128xf32>
    %7 = arith.addf %5, %6 : vector<8x128xf32>
    %c0_5 = arith.constant 0 : index
    %c0_6 = arith.constant 0 : index
    %8 = vector.load %arg3[%c0_5, %c0_6] : memref<8x128xf32, #tpu.memory_space<vmem>>, vector<8x128xf32>
    tpu.vector_store %arg3[%c0_5, %c0_6], %7 {strides = array<i32>} : memref<8x128xf32, #tpu.memory_space<vmem>>, vector<8x128xf32>,
    return
  }
  func.func @transform_0(%arg0: i32, %arg1: i32) -> (i32, i32) {
    %c0_i32 = arith.constant 0 : i32
    return %arg0, %arg1 : i32, i32
  }
  func.func @transform_1(%arg0: i32, %arg1: i32) -> (i32, i32) {
    %c0_i32 = arith.constant 0 : i32
    %c0_i32_0 = arith.constant 0 : i32
    return %arg0, %c0_i32 : i32, i32
  }
}

</mosaic_0001>

<llo_original>
// kernel: tpu_custom_call.1
$region0: #{tpu_custom_call.1}
  #allocation0 [shape = 'u32[]', space=smem, size = 0x4, offset = 0x4, fixed_abs, tag = 'smem constant byte address 0x4 - core index']
  #allocation1 [shape = 'u32[72,128]{1,0:T(1,128)}', space=vmem, size = 0x9000, scoped, tag = 'internal scratch']
  %s0 = inlined_call_operand.hbm [shape: f32[8,256], index: 0, kind: input, shape index: {}]
  %s1 = inlined_call_operand.hbm [shape: f32[8,128], index: 1, kind: output, shape index: {}]
  %s2 = sld [smem:[#allocation0]]
  $region22: #{tpu_custom_call.1} parent=0
    _
  %s4 = ssub.s32 1, %s2
  %s5 = scalar_select 0, %s4, %s2
  $region1: #{tpu_custom_call.1} parent=0
    #allocation2 [shape = 'u8[8192]{0}', space=vmem, size = 0x2000, scoped, tag = 'input window, operand 0, single buffered']
    #allocation3 [shape = 's32[1]{0}', space=sflag, size = 0x4, scoped, tag = 'scoped memory for tpu_custom_call.1']
    #allocation4 [shape = 's32[1]{0}', space=sflag, size = 0x4, scoped, tag = 'scoped memory for tpu_custom_call.1']
    #allocation5 [shape = 'u8[4096]{0}', space=vmem, size = 0x1000, scoped, tag = 'output window, operand 0, single buffered']
    %6 = vsyncpa [#allocation3], 0
    %7 = vsyncpa [#allocation4], 0
    // Predicated region
    $region2: #{tpu_custom_call.1} parent=1 // pred_check
      _
    $region3: #{tpu_custom_call.1} parent=1 // pred_check_branch
      %9 = sbr.rel (0) target = $region5
    $region4: #{tpu_custom_call.1} parent=1 // pred_region
      %11 = vsyncadd [#allocation3], 0
      %s13 = sshll.u32 %s0, 4
      %s14 = int_to_ptr.hbm [resolvable:$true] %s13
      %s15 = sshll.u32 [#allocation2], 4
      %s16 = int_to_ptr.vmem [resolvable:$true] %s15
      %18 = dma.hbm_to_vmem [thread:$0]  %s14, 256, %s16, [#allocation3]
    $region5: #{tpu_custom_call.1} parent=1 // pred_fallthru
      _
    // Predicated region
    $region6: #{tpu_custom_call.1} parent=1 // pred_check
      _
    $region7: #{tpu_custom_call.1} parent=1 // pred_check_branch
      %20 = sbr.rel (0) target = $region9
    $region8: #{tpu_custom_call.1} parent=1 // pred_region
      %22 = dma.done [#allocation3], 256
    $region9: #{tpu_custom_call.1} parent=1 // pred_fallthru
      _
    %p23 = scmp.eq.s32.totalorder 0, 0
    // Predicated region
    $region10: #{tpu_custom_call.1} parent=1 // pred_check
      %p24 = pneg %p23
    $region11: #{tpu_custom_call.1} parent=1 // pred_check_branch
      %26 = sbr.rel (%p24) target = $region13
    $region12: #{tpu_custom_call.1} parent=1 // pred_region
      %27 = vst [vmem:[#allocation5] sm:$0xff] 0.0
    $region13: #{tpu_custom_call.1} parent=1 // pred_fallthru
      _
    %v28 = vld [vmem:[#allocation5] sm:$0xff]
    %v29 = vld [vmem:[#allocation2] sm:$0xff]
    %v30 = vadd.f32 %v28, %v29
    %v31 = vld [vmem:[#allocation2 + $0x8] sm:$0xff]
    %v32 = vadd.f32 %v30, %v31
    %33 = vst [vmem:[#allocation5] sm:$0xff] %v32
    // Predicated region
    $region14: #{tpu_custom_call.1} parent=1 // pred_check
      _
    $region15: #{tpu_custom_call.1} parent=1 // pred_check_branch
      %35 = sbr.rel (0) target = $region17
    $region16: #{tpu_custom_call.1} parent=1 // pred_region
      %37 = vsyncadd [#allocation4], 0
      %s39 = sshll.u32 [#allocation5], 4
      %s40 = int_to_ptr.vmem [resolvable:$true] %s39
      %s41 = sshll.u32 %s1, 4
      %s42 = int_to_ptr.hbm [resolvable:$true] %s41
      %44 = dma.vmem_to_hbm [thread:$0]  %s40, 128, %s42, [#allocation4]
    $region17: #{tpu_custom_call.1} parent=1 // pred_fallthru
      _
    // Predicated region
    $region18: #{tpu_custom_call.1} parent=1 // pred_check
      _
    $region19: #{tpu_custom_call.1} parent=1 // pred_check_branch
      %46 = sbr.rel (0) target = $region21
    $region20: #{tpu_custom_call.1} parent=1 // pred_region
      %48 = dma.done [#allocation4], 128
    $region21: #{tpu_custom_call.1} parent=1 // pred_fallthru
      _
    %49 = vsyncpa [#allocation3], 1
    %50 = vsyncpa [#allocation4], 1

</llo_original>
